<compile_context>
chip_gen: v5e
topology: v5e:2x2
jax: 0.10.0
libtpu: 0.0.40
codegen_flags: <defaults>
</compile_context>

<pallas_src>
import math
import functools

import jax
import jax.numpy as jnp
from jax.experimental import pallas as pl
from jax.experimental.pallas import tpu as pltpu

D_WIDTH = 128  # hidden width of the MLP (matches nn.Linear(..., 128))


# --------------------------------------------------------------------------------------
# Kernel
# --------------------------------------------------------------------------------------
def _mlp_kernel(x_ref, w1_ref, b1_ref, w2_ref, b2_ref, w3_ref, b3_ref, o_ref):
    # x_ref:   (tile_b, D_in)  f32   (streamed batch tile; cast to bf16 here, not in XLA)
    # w*_ref:  bf16 (in, out) weights, VMEM-resident whole arrays (w3 padded to 128 cols)
    # b*_ref:  f32  (1, out)  biases  (b3 padded to 128 cols)
    # o_ref:   (tile_b, D_out) f32   (only the real output columns are stored)
    d_out = o_ref.shape[1]

    x = x_ref[...].astype(jnp.bfloat16)

    h1 = jnp.dot(x, w1_ref[...], preferred_element_type=jnp.float32) + b1_ref[...]
    h1 = jnp.maximum(h1, 0.0)                                   # ReLU in f32 (VPU)

    h2 = jnp.dot(h1.astype(jnp.bfloat16), w2_ref[...],
                 preferred_element_type=jnp.float32) + b2_ref[...]
    h2 = jnp.maximum(h2, 0.0)

    out = jnp.dot(h2.astype(jnp.bfloat16), w3_ref[...],
                  preferred_element_type=jnp.float32) + b3_ref[...]   # (tile_b, 128) f32

    # Store only the real output columns; rows of the (B, D_out) output are contiguous
    # in HBM so the writeback stays dense (stores are masked, not widened).
    o_ref[...] = out[:, :d_out].astype(o_ref.dtype)


# --------------------------------------------------------------------------------------
# Parameter preparation (one-time)
# --------------------------------------------------------------------------------------
def prepare_params(params):
    """Transpose to (in, out), cast weights to bf16 for the MXU, keep biases in f32.
    w3/b3 are zero-padded to 128 output columns (MXU-friendly); the kernel slices back
    to the true D_out before storing."""
    d_out = int(params["w3"].shape[0])

    w1t = params["w1"].T.astype(jnp.bfloat16)                        # (D_in, 128)
    w2t = params["w2"].T.astype(jnp.bfloat16)                        # (128, 128)
    w3t = jnp.zeros((D_WIDTH, D_WIDTH), jnp.bfloat16)
    w3t = w3t.at[:, :d_out].set(params["w3"].T.astype(jnp.bfloat16))  # (128, 128) padded

    b1 = params["b1"].reshape(1, -1).astype(jnp.float32)             # (1, 128)
    b2 = params["b2"].reshape(1, -1).astype(jnp.float32)             # (1, 128)
    b3 = jnp.zeros((1, D_WIDTH), jnp.float32)
    b3 = b3.at[:, :d_out].set(params["b3"].reshape(1, -1).astype(jnp.float32))

    return {"w1t": w1t, "b1": b1, "w2t": w2t, "b2": b2,
            "w3t": w3t, "b3": b3, "d_out": d_out}


# --------------------------------------------------------------------------------------
# pallas_call wrapper
# --------------------------------------------------------------------------------------
@functools.partial(jax.jit, static_argnames=("d_out", "tile_b"))
def _net_forward_prepared(x, w1t, b1, w2t, b2, w3t, b3, *, d_out, tile_b):
    B, d_in = x.shape
    n_tiles = pl.cdiv(B, tile_b)   # partial last block handled by Pallas masking

    param_bytes = sum(int(a.size) * a.dtype.itemsize for a in (w1t, b1, w2t, b2, w3t, b3))
    cost = pl.CostEstimate(
        flops=2 * B * (d_in * D_WIDTH + D_WIDTH * D_WIDTH + D_WIDTH * D_WIDTH),
        transcendentals=0,
        bytes_accessed=int(x.size) * x.dtype.itemsize + B * d_out * 4 + param_bytes,
    )

    resident = pl.BlockSpec(memory_space=pltpu.MemorySpace.VMEM)  # whole array, VMEM-resident

    return pl.pallas_call(
        _mlp_kernel,
        out_shape=jax.ShapeDtypeStruct((B, d_out), jnp.float32),
        grid=(n_tiles,),
        in_specs=[
            pl.BlockSpec((tile_b, d_in), lambda i: (i, 0)),   # X tile (streamed, double-buffered)
            resident,                                         # w1t (D_in, 128) bf16
            resident,                                         # b1  (1, 128)   f32
            resident,                                         # w2t (128, 128) bf16
            resident,                                         # b2  (1, 128)   f32
            resident,                                         # w3t (128, 128) bf16 (padded)
            resident,                                         # b3  (1, 128)   f32  (padded)
        ],
        out_specs=pl.BlockSpec((tile_b, d_out), lambda i: (i, 0)),
        compiler_params=pltpu.CompilerParams(
            dimension_semantics=("parallel",),                # v7x: shard batch over 2 TCs
        ),
        cost_estimate=cost,
    )(x, w1t, b1, w2t, b2, w3t, b3)


def _round_up(n, m):
    return ((n + m - 1) // m) * m


def _num_tensorcores():
    """2 TensorCores per chip on v7x; 1 on v5e/v6e."""
    try:
        kind = jax.devices()[0].device_kind.lower()
        return 2 if "v7" in kind else 1
    except Exception:  # pragma: no cover
        return 1


def _pick_tile_b(B, tile_b, max_tile_b):
    if tile_b is None:
        n_tc = _num_tensorcores()
        if n_tc > 1 and B >= 256:
            # v7x and enough work: >= 2 balanced grid steps so ("parallel",) splits
            # the batch across both TensorCores.
            tile_b = _round_up(pl.cdiv(B, n_tc), 16)
        else:
            # Single-TC chips (v5e/v6e) or tiny batches: fewest grid steps wins
            # (each extra step is ~0.35 us of pure overhead).
            tile_b = _round_up(B, 16)
    # 16-row alignment (bf16 packs 16 rows per sublane group); cap to amortize
    # per-step overhead while staying far below scoped VMEM on every generation.
    tile_b = max(16, _round_up(int(tile_b), 16))
    tile_b = min(tile_b, _round_up(B, 16), _round_up(int(max_tile_b), 16))
    return int(tile_b)


def net_forward(x, prep, tile_b=None, max_tile_b=1024):
    """x: (B, D_in) f32.  prep: output of prepare_params().  Returns (B, D_out) f32."""
    B = x.shape[0]
    tb = _pick_tile_b(B, tile_b, max_tile_b)
    return _net_forward_prepared(
        x, prep["w1t"], prep["b1"], prep["w2t"], prep["b2"], prep["w3t"], prep["b3"],
        d_out=prep["d_out"], tile_b=tb)


# --------------------------------------------------------------------------------------
# Init + references
# --------------------------------------------------------------------------------------
def init_params(key, d_in, d_out, d_width=D_WIDTH):
    """Deterministic init matching nn.Linear's U(-1/sqrt(fan_in), 1/sqrt(fan_in))."""
    ks = jax.random.split(key, 6)

    def lin(kw, kb, fan_in, fan_out):
        bound = 1.0 / math.sqrt(fan_in)
        w = jax.random.uniform(kw, (fan_out, fan_in), jnp.float32, -bound, bound)
        b = jax.random.uniform(kb, (fan_out,), jnp.float32, -bound, bound)
        return w, b

    w1, b1 = lin(ks[0], ks[1], d_in, d_width)
    w2, b2 = lin(ks[2], ks[3], d_width, d_width)
    w3, b3 = lin(ks[4], ks[5], d_width, d_out)
    return {"w1": w1, "b1": b1, "w2": w2, "b2": b2, "w3": w3, "b3": b3}


def _reference_f32(x, p):
    """Pure-f32 PyTorch-equivalent forward."""
    h1 = jnp.maximum(x @ p["w1"].T + p["b1"], 0.0)
    h2 = jnp.maximum(h1 @ p["w2"].T + p["b2"], 0.0)
    return h2 @ p["w3"].T + p["b3"]


def _reference_matched(x, prep):
    """Dtype-matched reference: identical bf16-MXU / f32-accumulate recipe as the kernel."""
    d_out = prep["d_out"]
    xb = x.astype(jnp.bfloat16)
    h1 = jnp.maximum(jnp.dot(xb, prep["w1t"], preferred_element_type=jnp.float32)
                     + prep["b1"], 0.0)
    h2 = jnp.maximum(jnp.dot(h1.astype(jnp.bfloat16), prep["w2t"],
                             preferred_element_type=jnp.float32) + prep["b2"], 0.0)
    out = jnp.dot(h2.astype(jnp.bfloat16), prep["w3t"],
                  preferred_element_type=jnp.float32) + prep["b3"]
    return out[:, :d_out]


# --------------------------------------------------------------------------------------
# Demo / self-test
# --------------------------------------------------------------------------------------
if __name__ == "__main__":
    # LunarLander-v2: observation dim 8, action dim 4.
    D_in, D_out = 8, 4
    batch = 200  # deliberately not a multiple of the tile to exercise boundary masking

    key = jax.random.PRNGKey(0)
    k_x, k_p = jax.random.split(key)
    x = jax.random.normal(k_x, (batch, D_in), jnp.float32)
    params = init_params(k_p, D_in, D_out)
    prep = prepare_params(params)

    # Multi-step grid path (4 steps, partial last block).
    out = jax.block_until_ready(net_forward(x, prep, tile_b=64))
    # Auto tile selection path (single tile covering the whole batch on v5e/v6e).
    out_auto = jax.block_until_ready(net_forward(x, prep))

    assert out.shape == (batch, D_out)
    assert out_auto.shape == (batch, D_out)

    ref_matched = _reference_matched(x, prep)   # same bf16/f32 recipe -> tight check
    ref_f32 = _reference_f32(x, params)         # pure-f32 PyTorch-equivalent

    # Tight check vs. dtype-matched reference: catches real kernel bugs.
    assert jnp.allclose(out, ref_matched, atol=5e-3, rtol=5e-3), "mismatch vs matched reference"
    assert jnp.allclose(out_auto, ref_matched, atol=5e-3, rtol=5e-3), "auto-tile mismatch"
    # bf16-approximation bound vs. the pure-f32 reference.
    assert jnp.allclose(out, ref_f32, atol=3e-2, rtol=3e-2), "mismatch vs f32 reference"

    print("KERNEL_OK")
</pallas_src>

<mosaic_0001>
module attributes {stable_mosaic.version = 11 : i64} {
  func.func @_mlp_kernel(%arg0: i32, %arg1: memref<64x8xf32, #tpu.memory_space<vmem>>, %arg2: memref<8x128xbf16, #tpu.memory_space<vmem>>, %arg3: memref<1x128xf32, #tpu.memory_space<vmem>>, %arg4: memref<128x128xbf16, #tpu.memory_space<vmem>>, %arg5: memref<1x128xf32, #tpu.memory_space<vmem>>, %arg6: memref<128x128xbf16, #tpu.memory_space<vmem>>, %arg7: memref<1x128xf32, #tpu.memory_space<vmem>>, %arg8: memref<64x4xf32, #tpu.memory_space<vmem>>) attributes {dimension_semantics = [#tpu.dimension_semantics<parallel>], iteration_bounds = array<i64: 4>, scalar_prefetch = 0 : i64, scratch_operands = 0 : i64, tpu.core_type = #tpu.core_type<tc>, window_params = [{transform_indices = @transform_0, window_bounds = array<i64: 64, 8>}, {pipeline_mode = #tpu.pipeline_mode<synchronous>, transform_indices = @transform_1, window_bounds = array<i64: 8, 128>}, {pipeline_mode = #tpu.pipeline_mode<synchronous>, transform_indices = @transform_2, window_bounds = array<i64: 1, 128>}, {pipeline_mode = #tpu.pipeline_mode<synchronous>, transform_indices = @transform_3, window_bounds = array<i64: 128, 128>}, {pipeline_mode = #tpu.pipeline_mode<synchronous>, transform_indices = @transform_4, window_bounds = array<i64: 1, 128>}, {pipeline_mode = #tpu.pipeline_mode<synchronous>, transform_indices = @transform_5, window_bounds = array<i64: 128, 128>}, {pipeline_mode = #tpu.pipeline_mode<synchronous>, transform_indices = @transform_6, window_bounds = array<i64: 1, 128>}, {transform_indices = @transform_7, window_bounds = array<i64: 64, 4>}]} {
    %c0 = arith.constant 0 : index
    %c0_0 = arith.constant 0 : index
    %0 = vector.load %arg1[%c0, %c0_0] : memref<64x8xf32, #tpu.memory_space<vmem>>, vector<64x8xf32>
    %1 = arith.truncf %0 : vector<64x8xf32> to vector<64x8xbf16>
    %c0_1 = arith.constant 0 : index
    %c0_2 = arith.constant 0 : index
    %2 = vector.load %arg2[%c0_1, %c0_2] : memref<8x128xbf16, #tpu.memory_space<vmem>>, vector<8x128xbf16>
    %cst = arith.constant dense<0.000000e+00> : vector<64x128xf32>
    %3 = tpu.matmul %1, %2, %cst {dimension_numbers = #tpu.dot_dimension_numbers<[1], [0], [0], [1], [0, 0, 1, 1], [], []>} : vector<64x8xbf16>, vector<8x128xbf16>, vector<64x128xf32> -> vector<64x128xf32>
    %c0_3 = arith.constant 0 : index
    %c0_4 = arith.constant 0 : index
    %4 = vector.load %arg3[%c0_3, %c0_4] : memref<1x128xf32, #tpu.memory_space<vmem>>, vector<1x128xf32>
    %5 = vector.broadcast %4 : vector<1x128xf32> to vector<64x128xf32>
    %6 = arith.addf %3, %5 : vector<64x128xf32>
    %cst_5 = arith.constant 0.000000e+00 : f32
    %7 = vector.broadcast %cst_5 : f32 to vector<64x128xf32>
    %8 = arith.maximumf %6, %7 : vector<64x128xf32>
    %9 = arith.truncf %8 : vector<64x128xf32> to vector<64x128xbf16>
    %c0_6 = arith.constant 0 : index
    %c0_7 = arith.constant 0 : index
    %10 = vector.load %arg4[%c0_6, %c0_7] : memref<128x128xbf16, #tpu.memory_space<vmem>>, vector<128x128xbf16>
    %cst_8 = arith.constant dense<0.000000e+00> : vector<64x128xf32>
    %11 = tpu.matmul %9, %10, %cst_8 {dimension_numbers = #tpu.dot_dimension_numbers<[1], [0], [0], [1], [0, 0, 1, 1], [], []>} : vector<64x128xbf16>, vector<128x128xbf16>, vector<64x128xf32> -> vector<64x128xf32>
    %c0_9 = arith.constant 0 : index
    %c0_10 = arith.constant 0 : index
    %12 = vector.load %arg5[%c0_9, %c0_10] : memref<1x128xf32, #tpu.memory_space<vmem>>, vector<1x128xf32>
    %13 = vector.broadcast %12 : vector<1x128xf32> to vector<64x128xf32>
    %14 = arith.addf %11, %13 : vector<64x128xf32>
    %cst_11 = arith.constant 0.000000e+00 : f32
    %15 = vector.broadcast %cst_11 : f32 to vector<64x128xf32>
    %16 = arith.maximumf %14, %15 : vector<64x128xf32>
    %17 = arith.truncf %16 : vector<64x128xf32> to vector<64x128xbf16>
    %c0_12 = arith.constant 0 : index
    %c0_13 = arith.constant 0 : index
    %18 = vector.load %arg6[%c0_12, %c0_13] : memref<128x128xbf16, #tpu.memory_space<vmem>>, vector<128x128xbf16>
    %cst_14 = arith.constant dense<0.000000e+00> : vector<64x128xf32>
    %19 = tpu.matmul %17, %18, %cst_14 {dimension_numbers = #tpu.dot_dimension_numbers<[1], [0], [0], [1], [0, 0, 1, 1], [], []>} : vector<64x128xbf16>, vector<128x128xbf16>, vector<64x128xf32> -> vector<64x128xf32>
    %c0_15 = arith.constant 0 : index
    %c0_16 = arith.constant 0 : index
    %20 = vector.load %arg7[%c0_15, %c0_16] : memref<1x128xf32, #tpu.memory_space<vmem>>, vector<1x128xf32>
    %21 = vector.broadcast %20 : vector<1x128xf32> to vector<64x128xf32>
    %22 = arith.addf %19, %21 : vector<64x128xf32>
    %23 = vector.extract_strided_slice %22 {offsets = [0, 0], sizes = [64, 4], strides = [1, 1]} : vector<64x128xf32> to vector<64x4xf32>
    %c0_17 = arith.constant 0 : index
    %c0_18 = arith.constant 0 : index
    %24 = vector.load %arg8[%c0_17, %c0_18] : memref<64x4xf32, #tpu.memory_space<vmem>>, vector<64x4xf32>
    tpu.vector_store %arg8[%c0_17, %c0_18], %23 {strides = array<i32>} : memref<64x4xf32, #tpu.memory_space<vmem>>, vector<64x4xf32>,
    return
  }
  func.func @transform_0(%arg0: i32) -> (i32, i32) {
    %c0_i32 = arith.constant 0 : i32
    %c0_i32_0 = arith.constant 0 : i32
    return %arg0, %c0_i32 : i32, i32
  }
  func.func @transform_1(%arg0: i32) -> (i32, i32) {
    %c0_i32 = arith.constant 0 : i32
    %c0_i32_0 = arith.constant 0 : i32
    %c0_i32_1 = arith.constant 0 : i32
    return %c0_i32, %c0_i32_0 : i32, i32
  }
  func.func @transform_2(%arg0: i32) -> (i32, i32) {
    %c0_i32 = arith.constant 0 : i32
    %c0_i32_0 = arith.constant 0 : i32
    %c0_i32_1 = arith.constant 0 : i32
    return %c0_i32, %c0_i32_0 : i32, i32
  }
  func.func @transform_3(%arg0: i32) -> (i32, i32) {
    %c0_i32 = arith.constant 0 : i32
    %c0_i32_0 = arith.constant 0 : i32
    %c0_i32_1 = arith.constant 0 : i32
    return %c0_i32, %c0_i32_0 : i32, i32
  }
  func.func @transform_4(%arg0: i32) -> (i32, i32) {
    %c0_i32 = arith.constant 0 : i32
    %c0_i32_0 = arith.constant 0 : i32
    %c0_i32_1 = arith.constant 0 : i32
    return %c0_i32, %c0_i32_0 : i32, i32
  }
  func.func @transform_5(%arg0: i32) -> (i32, i32) {
    %c0_i32 = arith.constant 0 : i32
    %c0_i32_0 = arith.constant 0 : i32
    %c0_i32_1 = arith.constant 0 : i32
    return %c0_i32, %c0_i32_0 : i32, i32
  }
  func.func @transform_6(%arg0: i32) -> (i32, i32) {
    %c0_i32 = arith.constant 0 : i32
    %c0_i32_0 = arith.constant 0 : i32
    %c0_i32_1 = arith.constant 0 : i32
    return %c0_i32, %c0_i32_0 : i32, i32
  }
  func.func @transform_7(%arg0: i32) -> (i32, i32) {
    %c0_i32 = arith.constant 0 : i32
    %c0_i32_0 = arith.constant 0 : i32
    return %arg0, %c0_i32 : i32, i32
  }
}

</mosaic_0001>

<llo_original>
// kernel: _net_forward_prepared.1
$region0: #{_net_forward_prepared.1}
  #allocation0 [shape = 'u32[]', space=smem, size = 0x4, offset = 0x4, fixed_abs, tag = 'smem constant byte address 0x4 - core index']
  #allocation1 [shape = 'u32[72,128]{1,0:T(1,128)}', space=vmem, size = 0x9000, scoped, tag = 'internal scratch']
  %s0 = inlined_call_operand.vmem [shape: f32[200,8], index: 0, kind: input, shape index: {}]
  %s1 = inlined_call_operand.vmem [shape: bf16[8,128], index: 1, kind: input, shape index: {}]
  %s2 = inlined_call_operand.vmem [shape: f32[1,128], index: 2, kind: input, shape index: {}]
  %s3 = inlined_call_operand.vmem [shape: bf16[128,128], index: 3, kind: input, shape index: {}]
  %s4 = inlined_call_operand.vmem [shape: f32[1,128], index: 4, kind: input, shape index: {}]
  %s5 = inlined_call_operand.vmem [shape: bf16[128,128], index: 5, kind: input, shape index: {}]
  %s6 = inlined_call_operand.vmem [shape: f32[1,128], index: 6, kind: input, shape index: {}]
  %s7 = inlined_call_operand.vmem [shape: f32[200,4], index: 7, kind: output, shape index: {}]
  %s8 = sld [smem:[#allocation0]]
  $region109: #{_net_forward_prepared.1} parent=0
    _
  %s10 = ssub.s32 1, %s8
  %s11 = scalar_select 0, %s10, %s8
  $region1: #{_net_forward_prepared.1} parent=0
    #allocation2 [shape = 'u8[65536]{0}', space=vmem, size = 0x10000, scoped, tag = 'output window, operand 0']
    loop: start=0, step=1, limit=6
    $region2: #{_net_forward_prepared.1} parent=1 // loop_pre_header
      _
    $region3: #{_net_forward_prepared.1} parent=1 // loop_header
      %s13 = sphi 0, %s17
      %p14 = scmp.ge.s32.totalorder %s13, 6
      %s23 = sphi 0, %s25
      %s26 = sphi 0, %s23
      %s27 = sphi 0, %s26
      %s43 = sphi 0, %s27
      %s47 = sphi 0, %s47
      %s49 = sphi 0, %s47
      %s50 = sphi 0, %s49
      %s64 = sphi 0, %s50
      %s68 = sphi 0, %s68
      %s70 = sphi 0, %s68
      %s71 = sphi 0, %s70
      %s85 = sphi 0, %s71
      %s89 = sphi 0, %s89
      %s91 = sphi 0, %s89
      %s92 = sphi 0, %s91
      %s106 = sphi 0, %s92
      %s110 = sphi 0, %s110
      %s112 = sphi 0, %s110
      %s113 = sphi 0, %s112
      %s127 = sphi 0, %s113
      %s131 = sphi 0, %s131
      %s133 = sphi 0, %s131
      %s134 = sphi 0, %s133
      %s148 = sphi 0, %s134
      %s152 = sphi 0, %s152
      %s154 = sphi 0, %s152
      %s155 = sphi 0, %s154
      %s169 = sphi 0, %s155
      %s175 = sphi 0, %s177
      %s178 = sphi 0, %s175
      %s179 = sphi 0, %s178
      %s195 = sphi 0, %s179
    $region4: #{_net_forward_prepared.1} parent=1 // loop_header_branch
      %16 = sbr.rel (%p14) target = $region8
    $region5: #{_net_forward_prepared.1} parent=1 // loop_body
      %s18 = ssub.s32 %s13, 1
      %s19 = ssub.s32 %s13, 2
      %s20 = sadd.s32 %s13, 1
      %s21 = ssub.s32 %s13, %s20
      %p22 = scmp.eq.s32.totalorder %s21, 0
      %s24 = sadd.s32 %s23, 1
      %s25 = scalar_select %p22, %s23, %s24
      %p28 = pneg %p22
      %p29 = scmp.eq.s32.totalorder %s13, 3
      %p30 = por %p28, %p29
      %p31 = scmp.ne.s32.totalorder %s23, %s26
      %p32 = scmp.eq.s32.totalorder %s13, 0
      %p33 = por %p31, %p32
      %p34 = scmp.ne.s32.totalorder %s23, %s26
      %p35 = scmp.eq.s32.totalorder %s18, 3
      %p36 = por %p34, %p35
      %p37 = scmp.ne.s32.totalorder %s26, %s27
      %p38 = scmp.eq.s32.totalorder %s18, 0
      %p39 = por %p37, %p38
      %p40 = scmp.ne.s32.totalorder %s26, %s27
      %p41 = scmp.eq.s32.totalorder %s19, 3
      %p42 = por %p40, %p41
      %p44 = scmp.ne.s32.totalorder %s27, %s43
      %p45 = scmp.eq.s32.totalorder %s19, 0
      %p46 = por %p44, %p45
      %s48 = sadd.s32 %s47, 1
      %p51 = scmp.eq.s32.totalorder %s13, 3
      %p52 = scmp.ne.s32.totalorder %s47, %s49
      %p53 = scmp.eq.s32.totalorder %s13, 0
      %p54 = por %p52, %p53
      %p55 = scmp.ne.s32.totalorder %s47, %s49
      %p56 = scmp.eq.s32.totalorder %s18, 3
      %p57 = por %p55, %p56
      %p58 = scmp.ne.s32.totalorder %s49, %s50
      %p59 = scmp.eq.s32.totalorder %s18, 0
      %p60 = por %p58, %p59
      %p61 = scmp.ne.s32.totalorder %s49, %s50
      %p62 = scmp.eq.s32.totalorder %s19, 3
      %p63 = por %p61, %p62
      %p65 = scmp.ne.s32.totalorder %s50, %s64
      %p66 = scmp.eq.s32.totalorder %s19, 0
      %p67 = por %p65, %p66
      %s69 = sadd.s32 %s68, 1
      %p72 = scmp.eq.s32.totalorder %s13, 3
      %p73 = scmp.ne.s32.totalorder %s68, %s70
      %p74 = scmp.eq.s32.totalorder %s13, 0
      %p75 = por %p73, %p74
      %p76 = scmp.ne.s32.totalorder %s68, %s70
      %p77 = scmp.eq.s32.totalorder %s18, 3
      %p78 = por %p76, %p77
      %p79 = scmp.ne.s32.totalorder %s70, %s71
      %p80 = scmp.eq.s32.totalorder %s18, 0
      %p81 = por %p79, %p80
      %p82 = scmp.ne.s32.totalorder %s70, %s71
      %p83 = scmp.eq.s32.totalorder %s19, 3
      %p84 = por %p82, %p83
      %p86 = scmp.ne.s32.totalorder %s71, %s85
      %p87 = scmp.eq.s32.totalorder %s19, 0
      %p88 = por %p86, %p87
      %s90 = sadd.s32 %s89, 1
      %p93 = scmp.eq.s32.totalorder %s13, 3
      %p94 = scmp.ne.s32.totalorder %s89, %s91
      %p95 = scmp.eq.s32.totalorder %s13, 0
      %p96 = por %p94, %p95
      %p97 = scmp.ne.s32.totalorder %s89, %s91
      %p98 = scmp.eq.s32.totalorder %s18, 3
      %p99 = por %p97, %p98
      %p100 = scmp.ne.s32.totalorder %s91, %s92
      %p101 = scmp.eq.s32.totalorder %s18, 0
      %p102 = por %p100, %p101
      %p103 = scmp.ne.s32.totalorder %s91, %s92
      %p104 = scmp.eq.s32.totalorder %s19, 3
      %p105 = por %p103, %p104
      %p107 = scmp.ne.s32.totalorder %s92, %s106
      %p108 = scmp.eq.s32.totalorder %s19, 0
      %p109 = por %p107, %p108
      %s111 = sadd.s32 %s110, 1
      %p114 = scmp.eq.s32.totalorder %s13, 3
      %p115 = scmp.ne.s32.totalorder %s110, %s112
      %p116 = scmp.eq.s32.totalorder %s13, 0
      %p117 = por %p115, %p116
      %p118 = scmp.ne.s32.totalorder %s110, %s112
      %p119 = scmp.eq.s32.totalorder %s18, 3
      %p120 = por %p118, %p119
      %p121 = scmp.ne.s32.totalorder %s112, %s113
      %p122 = scmp.eq.s32.totalorder %s18, 0
      %p123 = por %p121, %p122
      %p124 = scmp.ne.s32.totalorder %s112, %s113
      %p125 = scmp.eq.s32.totalorder %s19, 3
      %p126 = por %p124, %p125
      %p128 = scmp.ne.s32.totalorder %s113, %s127
      %p129 = scmp.eq.s32.totalorder %s19, 0
      %p130 = por %p128, %p129
      %s132 = sadd.s32 %s131, 1
      %p135 = scmp.eq.s32.totalorder %s13, 3
      %p136 = scmp.ne.s32.totalorder %s131, %s133
      %p137 = scmp.eq.s32.totalorder %s13, 0
      %p138 = por %p136, %p137
      %p139 = scmp.ne.s32.totalorder %s131, %s133
      %p140 = scmp.eq.s32.totalorder %s18, 3
      %p141 = por %p139, %p140
      %p142 = scmp.ne.s32.totalorder %s133, %s134
      %p143 = scmp.eq.s32.totalorder %s18, 0
      %p144 = por %p142, %p143
      %p145 = scmp.ne.s32.totalorder %s133, %s134
      %p146 = scmp.eq.s32.totalorder %s19, 3
      %p147 = por %p145, %p146
      %p149 = scmp.ne.s32.totalorder %s134, %s148
      %p150 = scmp.eq.s32.totalorder %s19, 0
      %p151 = por %p149, %p150
      %s153 = sadd.s32 %s152, 1
      %p156 = scmp.eq.s32.totalorder %s13, 3
      %p157 = scmp.ne.s32.totalorder %s152, %s154
      %p158 = scmp.eq.s32.totalorder %s13, 0
      %p159 = por %p157, %p158
      %p160 = scmp.ne.s32.totalorder %s152, %s154
      %p161 = scmp.eq.s32.totalorder %s18, 3
      %p162 = por %p160, %p161
      %p163 = scmp.ne.s32.totalorder %s154, %s155
      %p164 = scmp.eq.s32.totalorder %s18, 0
      %p165 = por %p163, %p164
      %p166 = scmp.ne.s32.totalorder %s154, %s155
      %p167 = scmp.eq.s32.totalorder %s19, 3
      %p168 = por %p166, %p167
      %p170 = scmp.ne.s32.totalorder %s155, %s169
      %p171 = scmp.eq.s32.totalorder %s19, 0
      %p172 = por %p170, %p171
      %s173 = ssub.s32 %s13, %s20
      %p174 = scmp.eq.s32.totalorder %s173, 0
      %s176 = sadd.s32 %s175, 1
      %s177 = scalar_select %p174, %s175, %s176
      %p180 = pneg %p174
      %p181 = scmp.eq.s32.totalorder %s13, 3
      %p182 = por %p180, %p181
      %p183 = scmp.ne.s32.totalorder %s175, %s178
      %p184 = scmp.eq.s32.totalorder %s13, 0
      %p185 = por %p183, %p184
      %p186 = scmp.ne.s32.totalorder %s175, %s178
      %p187 = scmp.eq.s32.totalorder %s18, 3
      %p188 = por %p186, %p187
      %p189 = scmp.ne.s32.totalorder %s178, %s179
      %p190 = scmp.eq.s32.totalorder %s18, 0
      %p191 = por %p189, %p190
      %p192 = scmp.ne.s32.totalorder %s178, %s179
      %p193 = scmp.eq.s32.totalorder %s19, 3
      %p194 = por %p192, %p193
      %p196 = scmp.ne.s32.totalorder %s179, %s195
      %p197 = scmp.eq.s32.totalorder %s19, 0
      %p198 = por %p196, %p197
      %p199 = scmp.le.s32.totalorder 1, %s13
      %p200 = scmp.lt.s32.totalorder %s13, 5
      %p201 = pnand %p199, %p200
      %p202 = pneg %p201
      // Predicated region
      $region9: #{_net_forward_prepared.1} parent=5 // pred_check
        _
      $region10: #{_net_forward_prepared.1} parent=5 // pred_check_branch
        %204 = sbr.rel (%p201) target = $region12
      $region11: #{_net_forward_prepared.1} parent=5 // pred_region
        %s205 = ssub.s32 %s13, 1
        // Predicated region
        $region13: #{_net_forward_prepared.1} parent=11 // pred_check
          %p206 = pneg %p60
        $region14: #{_net_forward_prepared.1} parent=11 // pred_check_branch
          %208 = sbr.rel (%p206) target = $region16
        $region15: #{_net_forward_prepared.1} parent=11 // pred_region
          _
        $region16: #{_net_forward_prepared.1} parent=11 // pred_fallthru
          _
        // Predicated region
        $region17: #{_net_forward_prepared.1} parent=11 // pred_check
          %p209 = pneg %p81
        $region18: #{_net_forward_prepared.1} parent=11 // pred_check_branch
          %211 = sbr.rel (%p209) target = $region20
        $region19: #{_net_forward_prepared.1} parent=11 // pred_region
          _
        $region20: #{_net_forward_prepared.1} parent=11 // pred_fallthru
          _
        // Predicated region
        $region21: #{_net_forward_prepared.1} parent=11 // pred_check
          %p212 = pneg %p102
        $region22: #{_net_forward_prepared.1} parent=11 // pred_check_branch
          %214 = sbr.rel (%p212) target = $region24
        $region23: #{_net_forward_prepared.1} parent=11 // pred_region
          _
        $region24: #{_net_forward_prepared.1} parent=11 // pred_fallthru
          _
        // Predicated region
        $region25: #{_net_forward_prepared.1} parent=11 // pred_check
          %p215 = pneg %p123
        $region26: #{_net_forward_prepared.1} parent=11 // pred_check_branch
          %217 = sbr.rel (%p215) target = $region28
        $region27: #{_net_forward_prepared.1} parent=11 // pred_region
          _
        $region28: #{_net_forward_prepared.1} parent=11 // pred_fallthru
          _
        // Predicated region
        $region29: #{_net_forward_prepared.1} parent=11 // pred_check
          %p218 = pneg %p144
        $region30: #{_net_forward_prepared.1} parent=11 // pred_check_branch
          %220 = sbr.rel (%p218) target = $region32
        $region31: #{_net_forward_prepared.1} parent=11 // pred_region
          _
        $region32: #{_net_forward_prepared.1} parent=11 // pred_fallthru
          _
        // Predicated region
        $region33: #{_net_forward_prepared.1} parent=11 // pred_check
          %p221 = pneg %p165
        $region34: #{_net_forward_prepared.1} parent=11 // pred_check_branch
          %223 = sbr.rel (%p221) target = $region36
        $region35: #{_net_forward_prepared.1} parent=11 // pred_region
          _
        $region36: #{_net_forward_prepared.1} parent=11 // pred_fallthru
          _
      $region12: #{_net_forward_prepared.1} parent=5 // pred_fallthru
        _
      %p224 = scmp.lt.s32.totalorder %s13, 4
      // Predicated region
      $region37: #{_net_forward_prepared.1} parent=5 // pred_check
        %p225 = pneg %p224
      $region38: #{_net_forward_prepared.1} parent=5 // pred_check_branch
        %227 = sbr.rel (%p225) target = $region40
      $region39: #{_net_forward_prepared.1} parent=5 // pred_region
        // Predicated region
        $region41: #{_net_forward_prepared.1} parent=39 // pred_check
          %p228 = pneg %p33
        $region42: #{_net_forward_prepared.1} parent=39 // pred_check_branch
          %230 = sbr.rel (%p228) target = $region44
        $region43: #{_net_forward_prepared.1} parent=39 // pred_region
          %s231 = smul.u32 8, %s13
          %s232 = ssub.s32 25, %s231
          %p233 = scmp.lt.s32.totalorder %s232, 8
          %s234 = scalar_select %p233, %s232, 8
          %s235 = smul.u32 8, %s234
          %p236 = scmp.lt.s32.totalorder %s231, 24
          %s237 = scalar_select %p236, %s231, 24
          %s238 = smul.addr %s237, 8
          %s239 = scalar_lea.vmem %s0, %s238
          %s240 = smul.u32 8, %s13
          %s241 = ssub.s32 25, %s240
          %p242 = scmp.lt.s32.totalorder %s241, 8
          %s243 = scalar_select %p242, %s241, 8
          %s244 = smul.u32 8, %s243
        $region44: #{_net_forward_prepared.1} parent=39 // pred_fallthru
          _
      $region40: #{_net_forward_prepared.1} parent=5 // pred_fallthru
        _
      %p245 = scmp.le.s32.totalorder 1, %s13
      %p246 = scmp.lt.s32.totalorder %s13, 5
      %p247 = pnand %p245, %p246
      %p248 = pneg %p247
      // Predicated region
      $region45: #{_net_forward_prepared.1} parent=5 // pred_check
        _
      $region46: #{_net_forward_prepared.1} parent=5 // pred_check_branch
        %250 = sbr.rel (%p247) target = $region48
      $region47: #{_net_forward_prepared.1} parent=5 // pred_region
        %s251 = ssub.s32 %s13, 1
        %s252 = smul.u32 8, %s18
        %s253 = ssub.s32 25, %s252
        %p254 = scmp.lt.s32.totalorder %s253, 8
        %s255 = scalar_select %p254, %s253, 8
        %s256 = smul.u32 8, %s255
        %p257 = scmp.lt.s32.totalorder %s252, 24
        %s258 = scalar_select %p257, %s252, 24
        %s259 = smul.addr %s258, 8
        %s260 = scalar_lea.vmem %s0, %s259
        %p261 = pneg %p39
        %p262 = pneg %p36
        %p263 = pneg %p60
        %p264 = pneg %p57
        %p265 = pneg %p81
        %p266 = pneg %p78
        %p267 = pneg %p102
        %p268 = pneg %p99
        %p269 = pneg %p123
        %p270 = pneg %p120
        %p271 = pneg %p144
        %p272 = pneg %p141
        %p273 = pneg %p165
        %p274 = pneg %p162
        %p275 = pneg %p191
        %p276 = pneg %p188
        %s277 = sand.u32 %s178, 1
        %s278 = sand.u32 %s178, 1
        %s279 = smul.addr %s278, 64
        %s280 = scalar_lea.vmem [#allocation2], %s279
        %s281 = smul.u32 8, %s18
        %s282 = ssub.s32 25, %s281
        %p283 = scmp.lt.s32.totalorder %s282, 8
        %s284 = scalar_select %p283, %s282, 8
        %s285 = smul.u32 8, %s284
        %p286 = scmp.lt.s32.totalorder %s281, 24
        %s287 = scalar_select %p286, %s281, 24
        %s288 = smul.addr %s287, 8
        %s289 = scalar_lea.vmem %s0, %s288
        %s290 = smul.u32 8, %s18
        %s291 = ssub.s32 25, %s290
        %p292 = scmp.lt.s32.totalorder %s291, 8
        %s293 = scalar_select %p292, %s291, 8
        %s294 = smul.u32 8, %s293
        %s295 = smul.u32 8, %s18
        %s296 = ssub.s32 25, %s295
        %p297 = scmp.lt.s32.totalorder %s296, 8
        %s298 = scalar_select %p297, %s296, 8
        %s299 = smul.u32 8, %s298
        %v301 = vld [vmem:[%s289] sm:$0xff]
        %v302 = vld [vmem:[%s289 + $0x8] sm:$0xff]
        %v303 = vld [vmem:[%s289 + $0x10] sm:$0xff]
        %v304 = vld [vmem:[%s289 + $0x18] sm:$0xff]
        %v305 = vld [vmem:[%s289 + $0x20] sm:$0xff]
        %v306 = vld [vmem:[%s289 + $0x28] sm:$0xff]
        %v307 = vld [vmem:[%s289 + $0x30] sm:$0xff]
        %v308 = vld [vmem:[%s289 + $0x38] sm:$0xff]
        %v309 = vpack.c.bf16 %v302, %v301
        %v310 = vpack.c.bf16 %v304, %v303
        %v311 = vpack.c.bf16 %v306, %v305
        %v312 = vpack.c.bf16 %v308, %v307
        %v313 = vld [vmem:[%s1] sm:$0xf]
        %v314 = vld [vmem:[%s2] sm:$0x1]
        %v316 = vperm.slane %v314, 0
        %vm318 = vcmask 64512
        %v320 = vsel %vm318, %v309, 0
        %v323 = vsel %vm318, %v310, 0
        %v326 = vsel %vm318, %v311, 0
        %v329 = vsel %vm318, %v312, 0
        %vm331 = vcmask 1043456
        %v333 = vsel %vm331, %v313, 0
        %335 = vmatpush.bf16.msra.mxu0 0
        %336 = vmatpush.bf16.msra.mxu0 0
        %337 = vmatpush.bf16.msra.mxu0 0
        %338 = vmatpush.bf16.msra.mxu0 0
        %339 = vmatpush.bf16.msra.mxu0 0
        %340 = vmatpush.bf16.msra.mxu0 0
        %341 = vmatpush.bf16.msra.mxu0 0
        %342 = vmatpush.bf16.msra.mxu0 %v333
        %343 = vmatmul.bf16.gmra.mxu0 %v320
        %v344 = vpop.f32.mrf.mxu0
        %v345 = vadd.f32 %v316, %v344
        %v346 = vpop.f32.mrf.mxu0
        %v347 = vadd.f32 %v316, %v346
        %348 = vmatmul.bf16.gmra.mxu0 %v323
        %v349 = vpop.f32.mrf.mxu0
        %v350 = vadd.f32 %v316, %v349
        %v351 = vpop.f32.mrf.mxu0
        %v352 = vadd.f32 %v316, %v351
        %353 = vmatmul.bf16.gmra.mxu0 %v326
        %v354 = vpop.f32.mrf.mxu0
        %v355 = vadd.f32 %v316, %v354
        %v356 = vpop.f32.mrf.mxu0
        %v357 = vadd.f32 %v316, %v356
        %358 = vmatmul.bf16.gmra.mxu0 %v329
        %v359 = vpop.f32.mrf.mxu0
        %v360 = vadd.f32 %v316, %v359
        %v361 = vpop.f32.mrf.mxu0
        %v362 = vadd.f32 %v316, %v361
        %363 = vdwg.mxu0
        %v364 = vmax.f32 %v345, 0.0
        %v365 = vmax.f32 %v347, 0.0
        %v366 = vmax.f32 %v350, 0.0
        %v367 = vmax.f32 %v352, 0.0
        %v368 = vmax.f32 %v355, 0.0
        %v369 = vmax.f32 %v357, 0.0
        %v370 = vmax.f32 %v360, 0.0
        %v371 = vmax.f32 %v362, 0.0
        %v372 = vpack.c.bf16 %v365, %v364
        %v373 = vpack.c.bf16 %v367, %v366
        %v374 = vpack.c.bf16 %v369, %v368
        %v375 = vpack.c.bf16 %v371, %v370
        %v376 = vld [vmem:[%s3] sm:$0xf]
        %v377 = vld [vmem:[%s3 + $0x4] sm:$0xf]
        %v378 = vld [vmem:[%s3 + $0x8] sm:$0xf]
        %v379 = vld [vmem:[%s3 + $0xc] sm:$0xf]
        %v380 = vld [vmem:[%s3 + $0x10] sm:$0xf]
        %v381 = vld [vmem:[%s3 + $0x14] sm:$0xf]
        %v382 = vld [vmem:[%s3 + $0x18] sm:$0xf]
        %v383 = vld [vmem:[%s3 + $0x1c] sm:$0xf]
        %v384 = vld [vmem:[%s3 + $0x20] sm:$0xf]
        %v385 = vld [vmem:[%s3 + $0x24] sm:$0xf]
        %v386 = vld [vmem:[%s3 + $0x28] sm:$0xf]
        %v387 = vld [vmem:[%s3 + $0x2c] sm:$0xf]
        %v388 = vld [vmem:[%s3 + $0x30] sm:$0xf]
        %v389 = vld [vmem:[%s3 + $0x34] sm:$0xf]
        %v390 = vld [vmem:[%s3 + $0x38] sm:$0xf]
        %v391 = vld [vmem:[%s3 + $0x3c] sm:$0xf]
        %v392 = vld [vmem:[%s4] sm:$0x1]
        %v394 = vperm.slane %v392, 0
        %v412 = vunpack.c.l.b16 %v376
        %v413 = vunpack.c.l.b16 %v377
        %v414 = vunpack.c.l.b16 %v378
        %v415 = vunpack.c.l.b16 %v379
        %v416 = vunpack.c.l.b16 %v380
        %v417 = vunpack.c.l.b16 %v381
        %v418 = vunpack.c.l.b16 %v382
        %v419 = vunpack.c.l.b16 %v383
        %v420 = vunpack.c.l.b16 %v384
        %v421 = vunpack.c.l.b16 %v385
        %v422 = vunpack.c.l.b16 %v386
        %v423 = vunpack.c.l.b16 %v387
        %v424 = vunpack.c.l.b16 %v388
        %v425 = vunpack.c.l.b16 %v389
        %v426 = vunpack.c.l.b16 %v390
        %v427 = vunpack.c.l.b16 %v391
        %v428 = vpack.c.b16 %v413, %v412
        %v429 = vpack.c.b16 %v415, %v414
        %v430 = vpack.c.b16 %v417, %v416
        %v431 = vpack.c.b16 %v419, %v418
        %v432 = vpack.c.b16 %v421, %v420
        %v433 = vpack.c.b16 %v423, %v422
        %v434 = vpack.c.b16 %v425, %v424
        %v435 = vpack.c.b16 %v427, %v426
        %444 = vmatpush.bf16.msra.mxu0 %v435
        %445 = vmatpush.bf16.msra.mxu0 %v434
        %446 = vmatpush.bf16.msra.mxu0 %v433
        %447 = vmatpush.bf16.msra.mxu0 %v432
        %448 = vmatpush.bf16.msra.mxu0 %v431
        %449 = vmatpush.bf16.msra.mxu0 %v430
        %450 = vmatpush.bf16.msra.mxu0 %v429
        %451 = vmatpush.bf16.msra.mxu0 %v428
        %452 = vmatmul.bf16.gmra.mxu0 %v372
        %v453 = vpop.f32.mrf.mxu0
        %v454 = vadd.f32 %v394, %v453
        %v455 = vpop.f32.mrf.mxu0
        %v456 = vadd.f32 %v394, %v455
        %457 = vmatmul.bf16.gmra.mxu0 %v373
        %v458 = vpop.f32.mrf.mxu0
        %v459 = vadd.f32 %v394, %v458
        %v460 = vpop.f32.mrf.mxu0
        %v461 = vadd.f32 %v394, %v460
        %462 = vmatmul.bf16.gmra.mxu0 %v374
        %v463 = vpop.f32.mrf.mxu0
        %v464 = vadd.f32 %v394, %v463
        %v465 = vpop.f32.mrf.mxu0
        %v466 = vadd.f32 %v394, %v465
        %467 = vmatmul.bf16.gmra.mxu0 %v375
        %v468 = vpop.f32.mrf.mxu0
        %v469 = vadd.f32 %v394, %v468
        %v470 = vpop.f32.mrf.mxu0
        %v471 = vadd.f32 %v394, %v470
        %472 = vdwg.mxu0
        %v473 = vmax.f32 %v454, 0.0
        %v474 = vmax.f32 %v456, 0.0
        %v475 = vmax.f32 %v459, 0.0
        %v476 = vmax.f32 %v461, 0.0
        %v477 = vmax.f32 %v464, 0.0
        %v478 = vmax.f32 %v466, 0.0
        %v479 = vmax.f32 %v469, 0.0
        %v480 = vmax.f32 %v471, 0.0
        %v481 = vpack.c.bf16 %v474, %v473
        %v482 = vpack.c.bf16 %v476, %v475
        %v483 = vpack.c.bf16 %v478, %v477
        %v484 = vpack.c.bf16 %v480, %v479
        %v485 = vld [vmem:[%s5] sm:$0xf]
        %v486 = vld [vmem:[%s5 + $0x4] sm:$0xf]
        %v487 = vld [vmem:[%s5 + $0x8] sm:$0xf]
        %v488 = vld [vmem:[%s5 + $0xc] sm:$0xf]
        %v489 = vld [vmem:[%s5 + $0x10] sm:$0xf]
        %v490 = vld [vmem:[%s5 + $0x14] sm:$0xf]
        %v491 = vld [vmem:[%s5 + $0x18] sm:$0xf]
        %v492 = vld [vmem:[%s5 + $0x1c] sm:$0xf]
        %v493 = vld [vmem:[%s5 + $0x20] sm:$0xf]
        %v494 = vld [vmem:[%s5 + $0x24] sm:$0xf]
        %v495 = vld [vmem:[%s5 + $0x28] sm:$0xf]
        %v496 = vld [vmem:[%s5 + $0x2c] sm:$0xf]
        %v497 = vld [vmem:[%s5 + $0x30] sm:$0xf]
        %v498 = vld [vmem:[%s5 + $0x34] sm:$0xf]
        %v499 = vld [vmem:[%s5 + $0x38] sm:$0xf]
        %v500 = vld [vmem:[%s5 + $0x3c] sm:$0xf]
        %v501 = vld [vmem:[%s6] sm:$0x1]
        %v503 = vperm.slane %v501, 0
        %v521 = vunpack.c.l.b16 %v485
        %v522 = vunpack.c.l.b16 %v486
        %v523 = vunpack.c.l.b16 %v487
        %v524 = vunpack.c.l.b16 %v488
        %v525 = vunpack.c.l.b16 %v489
        %v526 = vunpack.c.l.b16 %v490
        %v527 = vunpack.c.l.b16 %v491
        %v528 = vunpack.c.l.b16 %v492
        %v529 = vunpack.c.l.b16 %v493
        %v530 = vunpack.c.l.b16 %v494
        %v531 = vunpack.c.l.b16 %v495
        %v532 = vunpack.c.l.b16 %v496
        %v533 = vunpack.c.l.b16 %v497
        %v534 = vunpack.c.l.b16 %v498
        %v535 = vunpack.c.l.b16 %v499
        %v536 = vunpack.c.l.b16 %v500
        %v537 = vpack.c.b16 %v522, %v521
        %v538 = vpack.c.b16 %v524, %v523
        %v539 = vpack.c.b16 %v526, %v525
        %v540 = vpack.c.b16 %v528, %v527
        %v541 = vpack.c.b16 %v530, %v529
        %v542 = vpack.c.b16 %v532, %v531
        %v543 = vpack.c.b16 %v534, %v533
        %v544 = vpack.c.b16 %v536, %v535
        %553 = vmatpush.bf16.msra.mxu0 %v544
        %554 = vmatpush.bf16.msra.mxu0 %v543
        %555 = vmatpush.bf16.msra.mxu0 %v542
        %556 = vmatpush.bf16.msra.mxu0 %v541
        %557 = vmatpush.bf16.msra.mxu0 %v540
        %558 = vmatpush.bf16.msra.mxu0 %v539
        %559 = vmatpush.bf16.msra.mxu0 %v538
        %560 = vmatpush.bf16.msra.mxu0 %v537
        %561 = vmatmul.bf16.gmra.mxu0 %v481
        %v562 = vpop.f32.mrf.mxu0
        %v563 = vadd.f32 %v503, %v562
        %v564 = vpop.f32.mrf.mxu0
        %v565 = vadd.f32 %v503, %v564
        %566 = vmatmul.bf16.gmra.mxu0 %v482
        %v567 = vpop.f32.mrf.mxu0
        %v568 = vadd.f32 %v503, %v567
        %v569 = vpop.f32.mrf.mxu0
        %v570 = vadd.f32 %v503, %v569
        %571 = vmatmul.bf16.gmra.mxu0 %v483
        %v572 = vpop.f32.mrf.mxu0
        %v573 = vadd.f32 %v503, %v572
        %v574 = vpop.f32.mrf.mxu0
        %v575 = vadd.f32 %v503, %v574
        %576 = vmatmul.bf16.gmra.mxu0 %v484
        %v577 = vpop.f32.mrf.mxu0
        %v578 = vadd.f32 %v503, %v577
        %v579 = vpop.f32.mrf.mxu0
        %v580 = vadd.f32 %v503, %v579
        %581 = vdwg.mxu0
        %vm582 = vcmask 31744
        %583 = vst.msk [vmem:[%s280] sm:$0xff] %vm582, %v563
        %584 = vst.msk [vmem:[%s280 + $0x8] sm:$0xff] %vm582, %v565
        %585 = vst.msk [vmem:[%s280 + $0x10] sm:$0xff] %vm582, %v568
        %586 = vst.msk [vmem:[%s280 + $0x18] sm:$0xff] %vm582, %v570
        %587 = vst.msk [vmem:[%s280 + $0x20] sm:$0xff] %vm582, %v573
        %588 = vst.msk [vmem:[%s280 + $0x28] sm:$0xff] %vm582, %v575
        %589 = vst.msk [vmem:[%s280 + $0x30] sm:$0xff] %vm582, %v578
        %590 = vst.msk [vmem:[%s280 + $0x38] sm:$0xff] %vm582, %v580
        %s591 = sand.u32 %s178, 1
        %s592 = sand.u32 %s178, 1
        %s593 = smul.addr %s592, 64
        %s594 = scalar_lea.vmem [#allocation2], %s593
        // Predicated region
        $region49: #{_net_forward_prepared.1} parent=47 // pred_check
          %p595 = pneg %p188
        $region50: #{_net_forward_prepared.1} parent=47 // pred_check_branch
          %597 = sbr.rel (%p595) target = $region52
        $region51: #{_net_forward_prepared.1} parent=47 // pred_region
          %s598 = smul.u32 8, %s18
          %s599 = ssub.s32 25, %s598
          %p600 = scmp.lt.s32.totalorder %s599, 8
          %s601 = scalar_select %p600, %s599, 8
          %s602 = smul.u32 8, %s601
          %p603 = scmp.ne.s32.totalorder 0, %s602
          %s604 = smul.addr %s598, 8
          %s605 = scalar_lea.vmem %s7, %s604
          // Predicated region
          $region53: #{_net_forward_prepared.1} parent=51 // pred_check
            %p606 = pneg %p603
          $region54: #{_net_forward_prepared.1} parent=51 // pred_check_branch
            %608 = sbr.rel (%p606) target = $region56
          $region55: #{_net_forward_prepared.1} parent=51 // pred_region
            // Predicated region
            $region57: #{_net_forward_prepared.1} parent=55 // pred_check
              _
            $region58: #{_net_forward_prepared.1} parent=55 // pred_check_branch
              %610 = sbr.rel (0) target = $region60
            $region59: #{_net_forward_prepared.1} parent=55 // pred_region
              // Predicated region
              $region79: #{_net_forward_prepared.1} parent=59 // pred_check
                _
              $region80: #{_net_forward_prepared.1} parent=59 // pred_check_branch
                %674 = sbr.rel (0) target = $region82
              $region81: #{_net_forward_prepared.1} parent=59 // pred_region
                %s675 = sshrl.u32 %s601, 3
                // While loop
                $region83: #{_net_forward_prepared.1} parent=81 // loop_pre_header
                  _
                $region84: #{_net_forward_prepared.1} parent=81 // loop_header
                  %s677 = sphi 0, %s679
                  %p678 = scmp.ge.s32.totalorder %s677, %s675
                  %s682 = sphi 0, %s703
                  %s683 = sphi %s594, %s706
                  %s684 = sphi %s605, %s707
                $region85: #{_net_forward_prepared.1} parent=81 // loop_header_branch
                  %681 = sbr.rel (%p678) target = $region89
                $region86: #{_net_forward_prepared.1} parent=81 // loop_body
                  %v685 = vld [vmem:[%s683] sm:$0xff]
                  %686 = vst [vmem:[%s684] sm:$0xff] %v685
                  %v687 = vld [vmem:[%s683 + $0x8] sm:$0xff]
                  %688 = vst [vmem:[%s684 + $0x8] sm:$0xff] %v687
                  %v689 = vld [vmem:[%s683 + $0x10] sm:$0xff]
                  %690 = vst [vmem:[%s684 + $0x10] sm:$0xff] %v689
                  %v691 = vld [vmem:[%s683 + $0x18] sm:$0xff]
                  %692 = vst [vmem:[%s684 + $0x18] sm:$0xff] %v691
                  %v693 = vld [vmem:[%s683 + $0x20] sm:$0xff]
                  %694 = vst [vmem:[%s684 + $0x20] sm:$0xff] %v693
                  %v695 = vld [vmem:[%s683 + $0x28] sm:$0xff]
                  %696 = vst [vmem:[%s684 + $0x28] sm:$0xff] %v695
                  %v697 = vld [vmem:[%s683 + $0x30] sm:$0xff]
                  %698 = vst [vmem:[%s684 + $0x30] sm:$0xff] %v697
                  %v699 = vld [vmem:[%s683 + $0x38] sm:$0xff]
                  %700 = vst [vmem:[%s684 + $0x38] sm:$0xff] %v699
                  %s701 = sadd.s32 1, %s682
                  %p702 = scmp.ge.s32.totalorder %s701, %s675
                  %s703 = scalar_select %p702, 0, %s701
                  %s704 = smul.u32 %s703, 64
                  %s705 = smul.u32 %s703, 64
                  %s706 = scalar_lea.vmem %s594, %s704 [#allocation2]
                  %s707 = scalar_lea.vmem %s605, %s705
                $region87: #{_net_forward_prepared.1} parent=81 // loop_footer
                  %s679 = sadd.s32 %s677, 1
                $region88: #{_net_forward_prepared.1} parent=81 // loop_footer_branch
                  %676 = sbr.rel target = $region84
                $region89: #{_net_forward_prepared.1} parent=81 // loop_exit
                  _
                %s708 = sshrl.u32 %s601, 3
                %s709 = sand.u32 %s601, 7
                %s710 = smul.u32 %s708, 8
                %s711 = smul.u32 8, %s710
                %s712 = scalar_lea.vmem %s594, %s711 [#allocation2]
                %s713 = smul.u32 8, %s710
                %s714 = scalar_lea.vmem %s605, %s713
                // While loop
                $region90: #{_net_forward_prepared.1} parent=81 // loop_pre_header
                  _
                $region91: #{_net_forward_prepared.1} parent=81 // loop_header
                  %s716 = sphi 0, %s718
                  %p717 = scmp.ge.s32.totalorder %s716, %s709
                  %s721 = sphi 0, %s728
                  %s722 = sphi %s712, %s731
                  %s723 = sphi %s714, %s732
                $region92: #{_net_forward_prepared.1} parent=81 // loop_header_branch
                  %720 = sbr.rel (%p717) target = $region96
                $region93: #{_net_forward_prepared.1} parent=81 // loop_body
                  %v724 = vld [vmem:[%s722] sm:$0xff]
                  %725 = vst [vmem:[%s723] sm:$0xff] %v724
                  %s726 = sadd.s32 1, %s721
                  %p727 = scmp.ge.s32.totalorder %s726, %s709
                  %s728 = scalar_select %p727, 0, %s726
                  %s729 = smul.u32 %s728, 8
                  %s730 = smul.u32 %s728, 8
                  %s731 = scalar_lea.vmem %s712, %s729 [#allocation2]
                  %s732 = scalar_lea.vmem %s714, %s730
                $region94: #{_net_forward_prepared.1} parent=81 // loop_footer
                  %s718 = sadd.s32 %s716, 1
                $region95: #{_net_forward_prepared.1} parent=81 // loop_footer_branch
                  %715 = sbr.rel target = $region91
                $region96: #{_net_forward_prepared.1} parent=81 // loop_exit
                  _
              $region82: #{_net_forward_prepared.1} parent=59 // pred_fallthru
                _
              // Predicated region
              $region97: #{_net_forward_prepared.1} parent=59 // pred_check
                _
              $region98: #{_net_forward_prepared.1} parent=59 // pred_check_branch
                %734 = sbr.rel target = $region100
              $region99: #{_net_forward_prepared.1} parent=59 // pred_region
                _
              $region100: #{_net_forward_prepared.1} parent=59 // pred_fallthru
                _
            $region60: #{_net_forward_prepared.1} parent=55 // pred_fallthru
              _
            // Predicated region
            $region61: #{_net_forward_prepared.1} parent=55 // pred_check
              _
            $region62: #{_net_forward_prepared.1} parent=55 // pred_check_branch
              %612 = sbr.rel target = $region64
            $region63: #{_net_forward_prepared.1} parent=55 // pred_region
              %s614 = ssub.s32 256, 1
              %s615 = sshrl.u32 %s601, 3
              // While loop
              $region65: #{_net_forward_prepared.1} parent=63 // loop_pre_header
                _
              $region66: #{_net_forward_prepared.1} parent=63 // loop_header
                %s617 = sphi 0, %s619
                %p618 = scmp.ge.s32.totalorder %s617, %s615
                %s622 = sphi 0, %s643
                %s623 = sphi %s594, %s646
                %s624 = sphi %s605, %s647
              $region67: #{_net_forward_prepared.1} parent=63 // loop_header_branch
                %621 = sbr.rel (%p618) target = $region71
              $region68: #{_net_forward_prepared.1} parent=63 // loop_body
                %v625 = vld [vmem:[%s623] sm:%s614]
                %626 = vst [vmem:[%s624] sm:%s614] %v625
                %v627 = vld [vmem:[%s623 + $0x8] sm:%s614]
                %628 = vst [vmem:[%s624 + $0x8] sm:%s614] %v627
                %v629 = vld [vmem:[%s623 + $0x10] sm:%s614]
                %630 = vst [vmem:[%s624 + $0x10] sm:%s614] %v629
                %v631 = vld [vmem:[%s623 + $0x18] sm:%s614]
                %632 = vst [vmem:[%s624 + $0x18] sm:%s614] %v631
                %v633 = vld [vmem:[%s623 + $0x20] sm:%s614]
                %634 = vst [vmem:[%s624 + $0x20] sm:%s614] %v633
                %v635 = vld [vmem:[%s623 + $0x28] sm:%s614]
                %636 = vst [vmem:[%s624 + $0x28] sm:%s614] %v635
                %v637 = vld [vmem:[%s623 + $0x30] sm:%s614]
                %638 = vst [vmem:[%s624 + $0x30] sm:%s614] %v637
                %v639 = vld [vmem:[%s623 + $0x38] sm:%s614]
                %640 = vst [vmem:[%s624 + $0x38] sm:%s614] %v639
                %s641 = sadd.s32 1, %s622
                %p642 = scmp.ge.s32.totalorder %s641, %s615
                %s643 = scalar_select %p642, 0, %s641
                %s644 = smul.u32 %s643, 64
                %s645 = smul.u32 %s643, 64
                %s646 = scalar_lea.vmem %s594, %s644 [#allocation2]
                %s647 = scalar_lea.vmem %s605, %s645
              $region69: #{_net_forward_prepared.1} parent=63 // loop_footer
                %s619 = sadd.s32 %s617, 1
              $region70: #{_net_forward_prepared.1} parent=63 // loop_footer_branch
                %616 = sbr.rel target = $region66
              $region71: #{_net_forward_prepared.1} parent=63 // loop_exit
                _
              %s648 = sshrl.u32 %s601, 3
              %s649 = sand.u32 %s601, 7
              %s650 = smul.u32 %s648, 8
              %s651 = smul.u32 8, %s650
              %s652 = scalar_lea.vmem %s594, %s651 [#allocation2]
              %s653 = smul.u32 8, %s650
              %s654 = scalar_lea.vmem %s605, %s653
              // While loop
              $region72: #{_net_forward_prepared.1} parent=63 // loop_pre_header
                _
              $region73: #{_net_forward_prepared.1} parent=63 // loop_header
                %s656 = sphi 0, %s658
                %p657 = scmp.ge.s32.totalorder %s656, %s649
                %s661 = sphi 0, %s668
                %s662 = sphi %s652, %s671
                %s663 = sphi %s654, %s672
              $region74: #{_net_forward_prepared.1} parent=63 // loop_header_branch
                %660 = sbr.rel (%p657) target = $region78
              $region75: #{_net_forward_prepared.1} parent=63 // loop_body
                %v664 = vld [vmem:[%s662] sm:%s614]
                %665 = vst [vmem:[%s663] sm:%s614] %v664
                %s666 = sadd.s32 1, %s661
                %p667 = scmp.ge.s32.totalorder %s666, %s649
                %s668 = scalar_select %p667, 0, %s666
                %s669 = smul.u32 %s668, 8
                %s670 = smul.u32 %s668, 8
                %s671 = scalar_lea.vmem %s652, %s669 [#allocation2]
                %s672 = scalar_lea.vmem %s654, %s670
              $region76: #{_net_forward_prepared.1} parent=63 // loop_footer
                %s658 = sadd.s32 %s656, 1
              $region77: #{_net_forward_prepared.1} parent=63 // loop_footer_branch
                %655 = sbr.rel target = $region73
              $region78: #{_net_forward_prepared.1} parent=63 // loop_exit
                _
            $region64: #{_net_forward_prepared.1} parent=55 // pred_fallthru
              _
          $region56: #{_net_forward_prepared.1} parent=51 // pred_fallthru
            _
          %735 = vnop
        $region52: #{_net_forward_prepared.1} parent=47 // pred_fallthru
          _
      $region48: #{_net_forward_prepared.1} parent=5 // pred_fallthru
        _
      %p736 = scmp.le.s32.totalorder 2, %s13
      // Predicated region
      $region101: #{_net_forward_prepared.1} parent=5 // pred_check
        %p737 = pneg %p736
      $region102: #{_net_forward_prepared.1} parent=5 // pred_check_branch
        %739 = sbr.rel (%p737) target = $region104
      $region103: #{_net_forward_prepared.1} parent=5 // pred_region
        %s740 = ssub.s32 %s13, 2
        // Predicated region
        $region105: #{_net_forward_prepared.1} parent=103 // pred_check
          %p741 = pneg %p194
        $region106: #{_net_forward_prepared.1} parent=103 // pred_check_branch
          %743 = sbr.rel (%p741) target = $region108
        $region107: #{_net_forward_prepared.1} parent=103 // pred_region
          %s744 = sand.u32 %s179, 1
          %s745 = sand.u32 %s179, 1
          %s746 = smul.addr %s745, 64
          %s747 = scalar_lea.vmem [#allocation2], %s746
        $region108: #{_net_forward_prepared.1} parent=103 // pred_fallthru
          _
      $region104: #{_net_forward_prepared.1} parent=5 // pred_fallthru
        _
    $region6: #{_net_forward_prepared.1} parent=1 // loop_footer
      %s17 = sadd.s32 1, %s13
    $region7: #{_net_forward_prepared.1} parent=1 // loop_footer_branch
      %12 = sbr.rel target = $region3
    $region8: #{_net_forward_prepared.1} parent=1 // loop_exit
      _

</llo_original>
